<compile_context>
chip_gen: v6e
topology: v6e:2x2x1
jax: 0.10.0
libtpu: 0.0.40
codegen_flags: <defaults>
</compile_context>

<pallas_src>
import jax
import jax.numpy as jnp
from jax.experimental import pallas as pl
from jax.experimental.pallas import tpu as pltpu

PAD_TOKEN = 0


def _round_up(x, m):
    return (x + m - 1) // m * m


def _chip_config():
    """Per-generation tile sizes / VMEM budget (conservative fallback)."""
    try:
        kind = jax.devices()[0].device_kind.lower()
    except Exception:
        kind = ""
    if "v7" in kind:   # 64 MiB physical VMEM per TensorCore
        return {"vmem_limit": 48 * 1024 * 1024, "tv": 1024, "tb_cap": 256}
    if "v6" in kind:   # 128 MiB VMEM
        return {"vmem_limit": 96 * 1024 * 1024, "tv": 2048, "tb_cap": 256}
    if "v5" in kind:   # 128 MiB VMEM, smaller MXU
        return {"vmem_limit": 96 * 1024 * 1024, "tv": 2048, "tb_cap": 128}
    return {"vmem_limit": 48 * 1024 * 1024, "tv": 1024, "tb_cap": 128}


def _pad2(a, rows, cols, dtype):
    a = a.astype(dtype)
    return jnp.pad(a, ((0, rows - a.shape[0]), (0, cols - a.shape[1])))


# --------------------------------------------------------------------------
# Kernels
# --------------------------------------------------------------------------
def _cva_prologue_kernel(xl_ref, xb_ref, wq_ref, wv_ref, wout_ref, out_ref):
    """out_last = ((x_last @ Wq) * (mean_s(emb) @ Wv)) @ Wout for one batch block.

    xl_ref/xb_ref : (TB, Dp) bf16    wq/wv/wout : (Dp, Dp) bf16
    out_ref       : (TB, Dp) f32
    """
    q = jnp.dot(xl_ref[...], wq_ref[...], preferred_element_type=jnp.float32)
    ctx = jnp.dot(xb_ref[...], wv_ref[...], preferred_element_type=jnp.float32)
    h = (q * ctx).astype(wout_ref.dtype)       # elementwise stays f32 on the VPU
    out_ref[...] = jnp.dot(h, wout_ref[...], preferred_element_type=jnp.float32)


def _fc_head_kernel(ol_ref, wfc_ref, bfc_ref, o_ref):
    """logits tile = out_last @ wfc_tile + bias_tile.

    ol_ref : (TB, Dp) f32   wfc_ref : (Dp, TV) bf16   bfc_ref : (1, TV) f32
    o_ref  : (TB, TV) f32  (lane-dense store, TV multiple of 128)
    """
    logits = jnp.dot(ol_ref[...], wfc_ref[...].astype(jnp.float32),
                     preferred_element_type=jnp.float32)
    o_ref[...] = logits + bfc_ref[...]


# --------------------------------------------------------------------------
# One-time weight preprocessing (hoisted out of the per-call path)
# --------------------------------------------------------------------------
def prepare_params(emb_table, w_qv, w_out, w_fc, b_fc, cfg=None):
    cfg = cfg or _chip_config()
    V, D = emb_table.shape
    assert w_qv.shape == (2 * D, D)
    assert w_out.shape == (D, D)
    assert w_fc.shape == (V, D)
    assert b_fc.shape == (V,)

    Dp = _round_up(D, 128)
    Vp = _round_up(V, 128)
    TV = min(Vp, cfg["tv"])
    Vp = _round_up(Vp, TV)

    return {
        "emb": emb_table,                                   # gathered per call
        "wq": _pad2(w_qv[:D, :].T, Dp, Dp, jnp.bfloat16),   # (in, out)
        "wv": _pad2(w_qv[D:, :].T, Dp, Dp, jnp.bfloat16),
        "wout": _pad2(w_out.T, Dp, Dp, jnp.bfloat16),
        "wfc": _pad2(w_fc.T, Dp, Vp, jnp.bfloat16),         # (Dp, Vp)
        "bfc": _pad2(b_fc.reshape(1, V), 1, Vp, jnp.float32),
        "V": V, "D": D, "Dp": Dp, "Vp": Vp, "TV": TV,
        "cfg": cfg,
    }


# --------------------------------------------------------------------------
# Forward
# --------------------------------------------------------------------------
def cva_copying_forward(tokens, params):
    """tokens: (B, S) int32. Returns logits (B, vocab) in f32."""
    B, S = tokens.shape
    V, Dp, Vp, TV = params["V"], params["Dp"], params["Vp"], params["TV"]
    cfg = params["cfg"]

    # Embedding lookup + padding_idx mask (no O(V*D) table rewrite per call).
    x_seq = jnp.take(params["emb"], tokens, axis=0)               # (B, S, D)
    x_seq = jnp.where((tokens == PAD_TOKEN)[..., None], 0.0, x_seq)

    # Linearity fold: mean commutes with Wv; only the last row feeds the head.
    x_last = x_seq[:, -1, :]                                      # (B, D)
    x_bar = jnp.mean(x_seq, axis=1)                               # (B, D)

    TB = min(_round_up(max(B, 1), 16), cfg["tb_cap"])
    Bp = _round_up(B, TB)

    xl_p = _pad2(x_last, Bp, Dp, jnp.bfloat16)
    xb_p = _pad2(x_bar, Bp, Dp, jnp.bfloat16)

    # --- prologue: out_last = ((x_last Wq) * (x_bar Wv)) Wout, kept in f32 ---
    prologue_spec = pltpu.PrefetchScalarGridSpec(
        num_scalar_prefetch=0,
        grid=(Bp // TB,),
        in_specs=[
            pl.BlockSpec((TB, Dp), lambda ib: (ib, 0)),   # x_last block
            pl.BlockSpec((TB, Dp), lambda ib: (ib, 0)),   # x_bar block
            pl.BlockSpec((Dp, Dp), lambda ib: (0, 0)),    # Wq (resident)
            pl.BlockSpec((Dp, Dp), lambda ib: (0, 0)),    # Wv (resident)
            pl.BlockSpec((Dp, Dp), lambda ib: (0, 0)),    # Wout (resident)
        ],
        out_specs=pl.BlockSpec((TB, Dp), lambda ib: (ib, 0)),
    )
    out_last = pl.pallas_call(
        _cva_prologue_kernel,
        out_shape=jax.ShapeDtypeStruct((Bp, Dp), jnp.float32),
        grid_spec=prologue_spec,
        compiler_params=pltpu.CompilerParams(
            dimension_semantics=("parallel",),
            vmem_limit_bytes=cfg["vmem_limit"]),
    )(xl_p, xb_p, params["wq"], params["wv"], params["wout"])

    # --- fc head: vocab-OUTER grid so each w_fc tile is streamed exactly once
    head_spec = pltpu.PrefetchScalarGridSpec(
        num_scalar_prefetch=0,
        grid=(Vp // TV, Bp // TB),
        in_specs=[
            pl.BlockSpec((TB, Dp), lambda jv, ib: (ib, 0)),   # out_last (tiny)
            pl.BlockSpec((Dp, TV), lambda jv, ib: (0, jv)),   # w_fc tile
            pl.BlockSpec((1, TV), lambda jv, ib: (0, jv)),    # bias tile
        ],
        out_specs=pl.BlockSpec((TB, TV), lambda jv, ib: (ib, jv)),
    )
    logits_p = pl.pallas_call(
        _fc_head_kernel,
        out_shape=jax.ShapeDtypeStruct((Bp, Vp), jnp.float32),
        grid_spec=head_spec,
        compiler_params=pltpu.CompilerParams(
            dimension_semantics=("parallel", "parallel"),
            vmem_limit_bytes=cfg["vmem_limit"]),
    )(out_last, params["wfc"], params["bfc"])

    return logits_p[:B, :V]


# --------------------------------------------------------------------------
# Pure-JAX f32 reference mirroring the PyTorch forward exactly
# --------------------------------------------------------------------------
def _reference(tokens, emb_table, w_qv, w_out, w_fc, b_fc):
    D = emb_table.shape[1]
    x = emb_table[tokens]                                    # (B, S, D)
    x = jnp.where((tokens == PAD_TOKEN)[..., None], 0.0, x)  # padding_idx=0 row
    qv = x @ w_qv.T                                          # (B, S, 2D)
    q, v = qv[..., :D], qv[..., D:]
    context = jnp.mean(v, axis=1, keepdims=True)             # (B, 1, D)
    out = (q * context) @ w_out.T                            # (B, S, D)
    last = out[:, -1, :]                                     # (B, D)
    return last @ w_fc.T + b_fc                              # (B, V)


if __name__ == "__main__":
    # Small, deterministic setup (matches the PyTorch module's shapes).
    VOCAB = 16
    EMBED = 32
    BATCH = 2
    SEQ = 8

    key = jax.random.PRNGKey(0)
    k_emb, k_qv, k_out, k_fc, k_bfc, k_tok = jax.random.split(key, 6)

    emb_table = jax.random.normal(k_emb, (VOCAB, EMBED), jnp.float32)
    w_qv = jax.random.normal(k_qv, (2 * EMBED, EMBED), jnp.float32) * 0.1
    w_out = jax.random.normal(k_out, (EMBED, EMBED), jnp.float32) * 0.1
    w_fc = jax.random.normal(k_fc, (VOCAB, EMBED), jnp.float32) * 0.1
    b_fc = jax.random.normal(k_bfc, (VOCAB,), jnp.float32) * 0.1

    tokens = jax.random.randint(k_tok, (BATCH, SEQ), 0, VOCAB, dtype=jnp.int32)

    # One-time preprocessing (hoisted), then the per-call forward.
    params = prepare_params(emb_table, w_qv, w_out, w_fc, b_fc)
    logits = jax.block_until_ready(cva_copying_forward(tokens, params))

    ref = _reference(tokens, emb_table, w_qv, w_out, w_fc, b_fc)
    assert logits.shape == (BATCH, VOCAB)
    # bf16 MXU operands with f32 accumulation -> loosened tolerance vs f32 ref.
    assert jnp.allclose(logits, ref, atol=5e-2, rtol=5e-2), \
        float(jnp.max(jnp.abs(logits - ref)))

    print("KERNEL_OK")
</pallas_src>

<mosaic_0001>
module attributes {stable_mosaic.version = 11 : i64} {
  func.func @_cva_prologue_kernel(%arg0: i32, %arg1: memref<16x128xbf16, #tpu.memory_space<vmem>>, %arg2: memref<16x128xbf16, #tpu.memory_space<vmem>>, %arg3: memref<128x128xbf16, #tpu.memory_space<vmem>>, %arg4: memref<128x128xbf16, #tpu.memory_space<vmem>>, %arg5: memref<128x128xbf16, #tpu.memory_space<vmem>>, %arg6: memref<16x128xf32, #tpu.memory_space<vmem>>) attributes {dimension_semantics = [#tpu.dimension_semantics<parallel>], iteration_bounds = array<i64: 1>, scalar_prefetch = 0 : i64, scratch_operands = 0 : i64, tpu.core_type = #tpu.core_type<tc>, window_params = [{transform_indices = @transform_0, window_bounds = array<i64: 16, 128>}, {transform_indices = @transform_1, window_bounds = array<i64: 16, 128>}, {pipeline_mode = #tpu.pipeline_mode<synchronous>, transform_indices = @transform_2, window_bounds = array<i64: 128, 128>}, {pipeline_mode = #tpu.pipeline_mode<synchronous>, transform_indices = @transform_3, window_bounds = array<i64: 128, 128>}, {pipeline_mode = #tpu.pipeline_mode<synchronous>, transform_indices = @transform_4, window_bounds = array<i64: 128, 128>}, {transform_indices = @transform_5, window_bounds = array<i64: 16, 128>}]} {
    %c0 = arith.constant 0 : index
    %c0_0 = arith.constant 0 : index
    %0 = vector.load %arg1[%c0, %c0_0] : memref<16x128xbf16, #tpu.memory_space<vmem>>, vector<16x128xbf16>
    %c0_1 = arith.constant 0 : index
    %c0_2 = arith.constant 0 : index
    %1 = vector.load %arg3[%c0_1, %c0_2] : memref<128x128xbf16, #tpu.memory_space<vmem>>, vector<128x128xbf16>
    %cst = arith.constant dense<0.000000e+00> : vector<16x128xf32>
    %2 = tpu.matmul %0, %1, %cst {dimension_numbers = #tpu.dot_dimension_numbers<[1], [0], [0], [1], [0, 0, 1, 1], [], []>} : vector<16x128xbf16>, vector<128x128xbf16>, vector<16x128xf32> -> vector<16x128xf32>
    %c0_3 = arith.constant 0 : index
    %c0_4 = arith.constant 0 : index
    %3 = vector.load %arg2[%c0_3, %c0_4] : memref<16x128xbf16, #tpu.memory_space<vmem>>, vector<16x128xbf16>
    %c0_5 = arith.constant 0 : index
    %c0_6 = arith.constant 0 : index
    %4 = vector.load %arg4[%c0_5, %c0_6] : memref<128x128xbf16, #tpu.memory_space<vmem>>, vector<128x128xbf16>
    %cst_7 = arith.constant dense<0.000000e+00> : vector<16x128xf32>
    %5 = tpu.matmul %3, %4, %cst_7 {dimension_numbers = #tpu.dot_dimension_numbers<[1], [0], [0], [1], [0, 0, 1, 1], [], []>} : vector<16x128xbf16>, vector<128x128xbf16>, vector<16x128xf32> -> vector<16x128xf32>
    %6 = arith.mulf %2, %5 : vector<16x128xf32>
    %7 = arith.truncf %6 : vector<16x128xf32> to vector<16x128xbf16>
    %c0_8 = arith.constant 0 : index
    %c0_9 = arith.constant 0 : index
    %8 = vector.load %arg5[%c0_8, %c0_9] : memref<128x128xbf16, #tpu.memory_space<vmem>>, vector<128x128xbf16>
    %cst_10 = arith.constant dense<0.000000e+00> : vector<16x128xf32>
    %9 = tpu.matmul %7, %8, %cst_10 {dimension_numbers = #tpu.dot_dimension_numbers<[1], [0], [0], [1], [0, 0, 1, 1], [], []>} : vector<16x128xbf16>, vector<128x128xbf16>, vector<16x128xf32> -> vector<16x128xf32>
    %c0_11 = arith.constant 0 : index
    %c0_12 = arith.constant 0 : index
    %10 = vector.load %arg6[%c0_11, %c0_12] : memref<16x128xf32, #tpu.memory_space<vmem>>, vector<16x128xf32>
    tpu.vector_store %arg6[%c0_11, %c0_12], %9 {strides = array<i32>} : memref<16x128xf32, #tpu.memory_space<vmem>>, vector<16x128xf32>,
    return
  }
  func.func @transform_0(%arg0: i32) -> (i32, i32) {
    %c0_i32 = arith.constant 0 : i32
    %c0_i32_0 = arith.constant 0 : i32
    return %arg0, %c0_i32 : i32, i32
  }
  func.func @transform_1(%arg0: i32) -> (i32, i32) {
    %c0_i32 = arith.constant 0 : i32
    %c0_i32_0 = arith.constant 0 : i32
    return %arg0, %c0_i32 : i32, i32
  }
  func.func @transform_2(%arg0: i32) -> (i32, i32) {
    %c0_i32 = arith.constant 0 : i32
    %c0_i32_0 = arith.constant 0 : i32
    %c0_i32_1 = arith.constant 0 : i32
    return %c0_i32, %c0_i32_0 : i32, i32
  }
  func.func @transform_3(%arg0: i32) -> (i32, i32) {
    %c0_i32 = arith.constant 0 : i32
    %c0_i32_0 = arith.constant 0 : i32
    %c0_i32_1 = arith.constant 0 : i32
    return %c0_i32, %c0_i32_0 : i32, i32
  }
  func.func @transform_4(%arg0: i32) -> (i32, i32) {
    %c0_i32 = arith.constant 0 : i32
    %c0_i32_0 = arith.constant 0 : i32
    %c0_i32_1 = arith.constant 0 : i32
    return %c0_i32, %c0_i32_0 : i32, i32
  }
  func.func @transform_5(%arg0: i32) -> (i32, i32) {
    %c0_i32 = arith.constant 0 : i32
    %c0_i32_0 = arith.constant 0 : i32
    return %arg0, %c0_i32 : i32, i32
  }
}

</mosaic_0001>

<llo_original>
// kernel: tpu_custom_call.1
$region0: #{tpu_custom_call.1}
  #allocation0 [shape = 'u32[]', space=smem, size = 0x4, offset = 0x4, fixed_abs, tag = 'smem constant byte address 0x4 - core index']
  #allocation1 [shape = 'u32[144,128]{1,0:T(1,128)}', space=vmem, size = 0x12000, scoped, tag = 'internal scratch']
  %s0 = inlined_call_operand.hbm [shape: bf16[16,128], index: 0, kind: input, shape index: {}]
  %s1 = inlined_call_operand.hbm [shape: bf16[16,128], index: 1, kind: input, shape index: {}]
  %s2 = inlined_call_operand.hbm [shape: bf16[128,128], index: 2, kind: input, shape index: {}]
  %s3 = inlined_call_operand.hbm [shape: bf16[128,128], index: 3, kind: input, shape index: {}]
  %s4 = inlined_call_operand.hbm [shape: bf16[128,128], index: 4, kind: input, shape index: {}]
  %s5 = inlined_call_operand.hbm [shape: f32[16,128], index: 5, kind: output, shape index: {}]
  %s6 = sld [smem:[#allocation0]]
  $region50: #{tpu_custom_call.1} parent=0
    _
  %s8 = ssub.s32 1, %s6
  %s9 = scalar_select 0, %s8, %s6
  $region1: #{tpu_custom_call.1} parent=0
    #allocation2 [shape = 'u8[4096]{0}', space=vmem, size = 0x1000, scoped, tag = 'input window, operand 0, single buffered']
    #allocation3 [shape = 's32[1]{0}', space=sflag, size = 0x4, scoped, tag = 'scoped memory for tpu_custom_call.1']
    #allocation4 [shape = 's32[1]{0}', space=sflag, size = 0x4, scoped, tag = 'scoped memory for tpu_custom_call.1']
    #allocation5 [shape = 'u8[4096]{0}', space=vmem, size = 0x1000, scoped, tag = 'input window, operand 1, single buffered']
    #allocation6 [shape = 's32[1]{0}', space=sflag, size = 0x4, scoped, tag = 'scoped memory for tpu_custom_call.1']
    #allocation7 [shape = 'u8[32768]{0}', space=vmem, size = 0x8000, scoped, tag = 'input window, operand 2, single buffered']
    #allocation8 [shape = 'u8[32768]{0}', space=vmem, size = 0x8000, scoped, tag = 'input window, operand 3, single buffered']
    #allocation9 [shape = 's32[1]{0}', space=sflag, size = 0x4, scoped, tag = 'scoped memory for tpu_custom_call.1']
    #allocation10 [shape = 'u8[32768]{0}', space=vmem, size = 0x8000, scoped, tag = 'input window, operand 4, single buffered']
    #allocation11 [shape = 'u8[8192]{0}', space=vmem, size = 0x2000, scoped, tag = 'output window, operand 0, single buffered']
    %10 = vsyncpa [#allocation3], 0
    %11 = vsyncpa [#allocation6], 0
    %12 = vsyncpa [#allocation9], 0
    %13 = vsyncpa [#allocation4], 0
    // Predicated region
    $region2: #{tpu_custom_call.1} parent=1 // pred_check
      _
    $region3: #{tpu_custom_call.1} parent=1 // pred_check_branch
      %15 = sbr.rel (0) target = $region5
    $region4: #{tpu_custom_call.1} parent=1 // pred_region
      %s17 = ssub.s32 128, 128
      %18 = vsyncadd [#allocation3], %s17
      %s19 = sshll.u32 [#allocation2], 4
      %s20 = int_to_ptr.vmem [resolvable:$true] %s19
      %25 = dma.hbm_to_vmem [thread:$0]  %s0, 128, %s20, [#allocation3], 64, 64, 4
    $region5: #{tpu_custom_call.1} parent=1 // pred_fallthru
      _
    // Predicated region
    $region6: #{tpu_custom_call.1} parent=1 // pred_check
      _
    $region7: #{tpu_custom_call.1} parent=1 // pred_check_branch
      %27 = sbr.rel (0) target = $region9
    $region8: #{tpu_custom_call.1} parent=1 // pred_region
      %s29 = ssub.s32 128, 128
      %30 = vsyncadd [#allocation6], %s29
      %s31 = sshll.u32 [#allocation5], 4
      %s32 = int_to_ptr.vmem [resolvable:$true] %s31
      %37 = dma.hbm_to_vmem [thread:$0]  %s1, 128, %s32, [#allocation6], 64, 64, 4
    $region9: #{tpu_custom_call.1} parent=1 // pred_fallthru
      _
    // Predicated region
    $region10: #{tpu_custom_call.1} parent=1 // pred_check
      _
    $region11: #{tpu_custom_call.1} parent=1 // pred_check_branch
      %39 = sbr.rel (0) target = $region13
    $region12: #{tpu_custom_call.1} parent=1 // pred_region
      %s41 = ssub.s32 1024, 1024
      %42 = vsyncadd [#allocation6], %s41
      %s43 = sshll.u32 [#allocation7], 4
      %s44 = int_to_ptr.vmem [resolvable:$true] %s43
      %49 = dma.hbm_to_vmem [thread:$0]  %s2, 1024, %s44, [#allocation6], 64, 64, 4
    $region13: #{tpu_custom_call.1} parent=1 // pred_fallthru
      _
    // Predicated region
    $region14: #{tpu_custom_call.1} parent=1 // pred_check
      _
    $region15: #{tpu_custom_call.1} parent=1 // pred_check_branch
      %51 = sbr.rel (0) target = $region17
    $region16: #{tpu_custom_call.1} parent=1 // pred_region
      %s53 = ssub.s32 1024, 1024
      %54 = vsyncadd [#allocation9], %s53
      %s55 = sshll.u32 [#allocation8], 4
      %s56 = int_to_ptr.vmem [resolvable:$true] %s55
      %61 = dma.hbm_to_vmem [thread:$0]  %s3, 1024, %s56, [#allocation9], 64, 64, 4
    $region17: #{tpu_custom_call.1} parent=1 // pred_fallthru
      _
    // Predicated region
    $region18: #{tpu_custom_call.1} parent=1 // pred_check
      _
    $region19: #{tpu_custom_call.1} parent=1 // pred_check_branch
      %63 = sbr.rel (0) target = $region21
    $region20: #{tpu_custom_call.1} parent=1 // pred_region
      %s65 = ssub.s32 1024, 1024
      %66 = vsyncadd [#allocation9], %s65
      %s67 = sshll.u32 [#allocation10], 4
      %s68 = int_to_ptr.vmem [resolvable:$true] %s67
      %73 = dma.hbm_to_vmem [thread:$0]  %s4, 1024, %s68, [#allocation9], 64, 64, 4
    $region21: #{tpu_custom_call.1} parent=1 // pred_fallthru
      _
    // Predicated region
    $region22: #{tpu_custom_call.1} parent=1 // pred_check
      _
    $region23: #{tpu_custom_call.1} parent=1 // pred_check_branch
      %75 = sbr.rel (0) target = $region25
    $region24: #{tpu_custom_call.1} parent=1 // pred_region
      %76 = dma.done [#allocation3], 128
    $region25: #{tpu_custom_call.1} parent=1 // pred_fallthru
      _
    // Predicated region
    $region26: #{tpu_custom_call.1} parent=1 // pred_check
      _
    $region27: #{tpu_custom_call.1} parent=1 // pred_check_branch
      %78 = sbr.rel (0) target = $region29
    $region28: #{tpu_custom_call.1} parent=1 // pred_region
      %79 = dma.done [#allocation6], 128
    $region29: #{tpu_custom_call.1} parent=1 // pred_fallthru
      _
    // Predicated region
    $region30: #{tpu_custom_call.1} parent=1 // pred_check
      _
    $region31: #{tpu_custom_call.1} parent=1 // pred_check_branch
      %81 = sbr.rel (0) target = $region33
    $region32: #{tpu_custom_call.1} parent=1 // pred_region
      %82 = dma.done [#allocation6], 1024
    $region33: #{tpu_custom_call.1} parent=1 // pred_fallthru
      _
    // Predicated region
    $region34: #{tpu_custom_call.1} parent=1 // pred_check
      _
    $region35: #{tpu_custom_call.1} parent=1 // pred_check_branch
      %84 = sbr.rel (0) target = $region37
    $region36: #{tpu_custom_call.1} parent=1 // pred_region
      %85 = dma.done [#allocation9], 1024
    $region37: #{tpu_custom_call.1} parent=1 // pred_fallthru
      _
    // Predicated region
    $region38: #{tpu_custom_call.1} parent=1 // pred_check
      _
    $region39: #{tpu_custom_call.1} parent=1 // pred_check_branch
      %87 = sbr.rel (0) target = $region41
    $region40: #{tpu_custom_call.1} parent=1 // pred_region
      %88 = dma.done [#allocation9], 1024
    $region41: #{tpu_custom_call.1} parent=1 // pred_fallthru
      _
    %v90 = vld [vmem:[#allocation2] sm:$0xf]
    %v91 = vld [vmem:[#allocation2 + $0x4] sm:$0xf]
    %v92 = vld [vmem:[#allocation7] sm:$0xf]
    %v93 = vld [vmem:[#allocation7 + $0x4] sm:$0xf]
    %v94 = vld [vmem:[#allocation7 + $0x8] sm:$0xf]
    %v95 = vld [vmem:[#allocation7 + $0xc] sm:$0xf]
    %v96 = vld [vmem:[#allocation7 + $0x10] sm:$0xf]
    %v97 = vld [vmem:[#allocation7 + $0x14] sm:$0xf]
    %v98 = vld [vmem:[#allocation7 + $0x18] sm:$0xf]
    %v99 = vld [vmem:[#allocation7 + $0x1c] sm:$0xf]
    %v100 = vld [vmem:[#allocation7 + $0x20] sm:$0xf]
    %v101 = vld [vmem:[#allocation7 + $0x24] sm:$0xf]
    %v102 = vld [vmem:[#allocation7 + $0x28] sm:$0xf]
    %v103 = vld [vmem:[#allocation7 + $0x2c] sm:$0xf]
    %v104 = vld [vmem:[#allocation7 + $0x30] sm:$0xf]
    %v105 = vld [vmem:[#allocation7 + $0x34] sm:$0xf]
    %v106 = vld [vmem:[#allocation7 + $0x38] sm:$0xf]
    %v107 = vld [vmem:[#allocation7 + $0x3c] sm:$0xf]
    %v110 = vunpack.c.l.b16 %v90
    %v111 = vunpack.c.l.b16 %v91
    %v112 = vpack.c.b16 %v111, %v110
    %v130 = vunpack.c.l.b16 %v92
    %v131 = vunpack.c.l.b16 %v93
    %v132 = vunpack.c.l.b16 %v94
    %v133 = vunpack.c.l.b16 %v95
    %v134 = vunpack.c.l.b16 %v96
    %v135 = vunpack.c.l.b16 %v97
    %v136 = vunpack.c.l.b16 %v98
    %v137 = vunpack.c.l.b16 %v99
    %v138 = vunpack.c.l.b16 %v100
    %v139 = vunpack.c.l.b16 %v101
    %v140 = vunpack.c.l.b16 %v102
    %v141 = vunpack.c.l.b16 %v103
    %v142 = vunpack.c.l.b16 %v104
    %v143 = vunpack.c.l.b16 %v105
    %v144 = vunpack.c.l.b16 %v106
    %v145 = vunpack.c.l.b16 %v107
    %v146 = vpack.c.b16 %v131, %v130
    %v147 = vpack.c.b16 %v133, %v132
    %v148 = vpack.c.b16 %v135, %v134
    %v149 = vpack.c.b16 %v137, %v136
    %v150 = vpack.c.b16 %v139, %v138
    %v151 = vpack.c.b16 %v141, %v140
    %v152 = vpack.c.b16 %v143, %v142
    %v153 = vpack.c.b16 %v145, %v144
    %162 = vmatprep.subr.bf16.mxu0 0
    %163 = vmatpush1.bf16.msra.mxu0 %v153
    %164 = vmatprep.subr.bf16.mxu0 0
    %165 = vmatpush1.bf16.msra.mxu0 %v152
    %166 = vmatprep.subr.bf16.mxu0 0
    %167 = vmatpush1.bf16.msra.mxu0 %v151
    %168 = vmatprep.subr.bf16.mxu0 0
    %169 = vmatpush1.bf16.msra.mxu0 %v150
    %170 = vmatprep.subr.bf16.mxu0 0
    %171 = vmatpush1.bf16.msra.mxu0 %v149
    %172 = vmatprep.subr.bf16.mxu0 0
    %173 = vmatpush1.bf16.msra.mxu0 %v148
    %174 = vmatprep.subr.bf16.mxu0 0
    %175 = vmatpush1.bf16.msra.mxu0 %v147
    %176 = vmatprep.subr.bf16.mxu0 0
    %177 = vmatpush1.bf16.msra.mxu0 %v146
    %178 = vmatprep.subr.bf16.mxu0 0
    %179 = vmatpush2.bf16.msra.mxu0 0
    %180 = vmatprep.subr.bf16.mxu0 0
    %181 = vmatpush2.bf16.msra.mxu0 0
    %182 = vmatprep.subr.bf16.mxu0 0
    %183 = vmatpush2.bf16.msra.mxu0 0
    %184 = vmatprep.subr.bf16.mxu0 0
    %185 = vmatpush2.bf16.msra.mxu0 0
    %186 = vmatprep.subr.bf16.mxu0 0
    %187 = vmatpush2.bf16.msra.mxu0 0
    %188 = vmatprep.subr.bf16.mxu0 0
    %189 = vmatpush2.bf16.msra.mxu0 0
    %190 = vmatprep.subr.bf16.mxu0 0
    %191 = vmatpush2.bf16.msra.mxu0 0
    %192 = vmatprep.subr.bf16.mxu0 0
    %193 = vmatpush2.bf16.msra.mxu0 0
    %194 = vmatprep.mubr.bf16.mxu0 0
    %195 = vmatmul.mubr.bf16.gmra.mxu0 %v112
    %v196 = vpop.f32.mrf.mxu0
    %v197 = vadd.f32 0.0, %v196
    %v198 = vpop.f32.mrf.mxu0
    %v199 = vpop.f32.mrf.mxu0
    %v200 = vadd.f32 0.0, %v199
    %v201 = vpop.f32.mrf.mxu0
    %202 = vdwg.mxu0
    %v203 = vld [vmem:[#allocation5] sm:$0xf]
    %v204 = vld [vmem:[#allocation5 + $0x4] sm:$0xf]
    %v205 = vld [vmem:[#allocation8] sm:$0xf]
    %v206 = vld [vmem:[#allocation8 + $0x4] sm:$0xf]
    %v207 = vld [vmem:[#allocation8 + $0x8] sm:$0xf]
    %v208 = vld [vmem:[#allocation8 + $0xc] sm:$0xf]
    %v209 = vld [vmem:[#allocation8 + $0x10] sm:$0xf]
    %v210 = vld [vmem:[#allocation8 + $0x14] sm:$0xf]
    %v211 = vld [vmem:[#allocation8 + $0x18] sm:$0xf]
    %v212 = vld [vmem:[#allocation8 + $0x1c] sm:$0xf]
    %v213 = vld [vmem:[#allocation8 + $0x20] sm:$0xf]
    %v214 = vld [vmem:[#allocation8 + $0x24] sm:$0xf]
    %v215 = vld [vmem:[#allocation8 + $0x28] sm:$0xf]
    %v216 = vld [vmem:[#allocation8 + $0x2c] sm:$0xf]
    %v217 = vld [vmem:[#allocation8 + $0x30] sm:$0xf]
    %v218 = vld [vmem:[#allocation8 + $0x34] sm:$0xf]
    %v219 = vld [vmem:[#allocation8 + $0x38] sm:$0xf]
    %v220 = vld [vmem:[#allocation8 + $0x3c] sm:$0xf]
    %v223 = vunpack.c.l.b16 %v203
    %v224 = vunpack.c.l.b16 %v204
    %v225 = vpack.c.b16 %v224, %v223
    %v243 = vunpack.c.l.b16 %v205
    %v244 = vunpack.c.l.b16 %v206
    %v245 = vunpack.c.l.b16 %v207
    %v246 = vunpack.c.l.b16 %v208
    %v247 = vunpack.c.l.b16 %v209
    %v248 = vunpack.c.l.b16 %v210
    %v249 = vunpack.c.l.b16 %v211
    %v250 = vunpack.c.l.b16 %v212
    %v251 = vunpack.c.l.b16 %v213
    %v252 = vunpack.c.l.b16 %v214
    %v253 = vunpack.c.l.b16 %v215
    %v254 = vunpack.c.l.b16 %v216
    %v255 = vunpack.c.l.b16 %v217
    %v256 = vunpack.c.l.b16 %v218
    %v257 = vunpack.c.l.b16 %v219
    %v258 = vunpack.c.l.b16 %v220
    %v259 = vpack.c.b16 %v244, %v243
    %v260 = vpack.c.b16 %v246, %v245
    %v261 = vpack.c.b16 %v248, %v247
    %v262 = vpack.c.b16 %v250, %v249
    %v263 = vpack.c.b16 %v252, %v251
    %v264 = vpack.c.b16 %v254, %v253
    %v265 = vpack.c.b16 %v256, %v255
    %v266 = vpack.c.b16 %v258, %v257
    %275 = vmatprep.subr.bf16.mxu0 0
    %276 = vmatpush1.bf16.msra.mxu0 %v266
    %277 = vmatprep.subr.bf16.mxu0 0
    %278 = vmatpush1.bf16.msra.mxu0 %v265
    %279 = vmatprep.subr.bf16.mxu0 0
    %280 = vmatpush1.bf16.msra.mxu0 %v264
    %281 = vmatprep.subr.bf16.mxu0 0
    %282 = vmatpush1.bf16.msra.mxu0 %v263
    %283 = vmatprep.subr.bf16.mxu0 0
    %284 = vmatpush1.bf16.msra.mxu0 %v262
    %285 = vmatprep.subr.bf16.mxu0 0
    %286 = vmatpush1.bf16.msra.mxu0 %v261
    %287 = vmatprep.subr.bf16.mxu0 0
    %288 = vmatpush1.bf16.msra.mxu0 %v260
    %289 = vmatprep.subr.bf16.mxu0 0
    %290 = vmatpush1.bf16.msra.mxu0 %v259
    %291 = vmatprep.subr.bf16.mxu0 0
    %292 = vmatpush2.bf16.msra.mxu0 0
    %293 = vmatprep.subr.bf16.mxu0 0
    %294 = vmatpush2.bf16.msra.mxu0 0
    %295 = vmatprep.subr.bf16.mxu0 0
    %296 = vmatpush2.bf16.msra.mxu0 0
    %297 = vmatprep.subr.bf16.mxu0 0
    %298 = vmatpush2.bf16.msra.mxu0 0
    %299 = vmatprep.subr.bf16.mxu0 0
    %300 = vmatpush2.bf16.msra.mxu0 0
    %301 = vmatprep.subr.bf16.mxu0 0
    %302 = vmatpush2.bf16.msra.mxu0 0
    %303 = vmatprep.subr.bf16.mxu0 0
    %304 = vmatpush2.bf16.msra.mxu0 0
    %305 = vmatprep.subr.bf16.mxu0 0
    %306 = vmatpush2.bf16.msra.mxu0 0
    %307 = vmatprep.mubr.bf16.mxu0 0
    %308 = vmatmul.mubr.bf16.gmra.mxu0 %v225
    %v309 = vpop.f32.mrf.mxu0
    %v310 = vadd.f32 0.0, %v309
    %v311 = vpop.f32.mrf.mxu0
    %v312 = vpop.f32.mrf.mxu0
    %v313 = vadd.f32 0.0, %v312
    %v314 = vpop.f32.mrf.mxu0
    %315 = vdwg.mxu0
    %v316 = vmul.f32 %v197, %v310
    %v317 = vmul.f32 %v200, %v313
    %v318 = vpack.c.bf16 %v317, %v316
    %v319 = vld [vmem:[#allocation10] sm:$0xf]
    %v320 = vld [vmem:[#allocation10 + $0x4] sm:$0xf]
    %v321 = vld [vmem:[#allocation10 + $0x8] sm:$0xf]
    %v322 = vld [vmem:[#allocation10 + $0xc] sm:$0xf]
    %v323 = vld [vmem:[#allocation10 + $0x10] sm:$0xf]
    %v324 = vld [vmem:[#allocation10 + $0x14] sm:$0xf]
    %v325 = vld [vmem:[#allocation10 + $0x18] sm:$0xf]
    %v326 = vld [vmem:[#allocation10 + $0x1c] sm:$0xf]
    %v327 = vld [vmem:[#allocation10 + $0x20] sm:$0xf]
    %v328 = vld [vmem:[#allocation10 + $0x24] sm:$0xf]
    %v329 = vld [vmem:[#allocation10 + $0x28] sm:$0xf]
    %v330 = vld [vmem:[#allocation10 + $0x2c] sm:$0xf]
    %v331 = vld [vmem:[#allocation10 + $0x30] sm:$0xf]
    %v332 = vld [vmem:[#allocation10 + $0x34] sm:$0xf]
    %v333 = vld [vmem:[#allocation10 + $0x38] sm:$0xf]
    %v334 = vld [vmem:[#allocation10 + $0x3c] sm:$0xf]
    %v351 = vunpack.c.l.b16 %v319
    %v352 = vunpack.c.l.b16 %v320
    %v353 = vunpack.c.l.b16 %v321
    %v354 = vunpack.c.l.b16 %v322
    %v355 = vunpack.c.l.b16 %v323
    %v356 = vunpack.c.l.b16 %v324
    %v357 = vunpack.c.l.b16 %v325
    %v358 = vunpack.c.l.b16 %v326
    %v359 = vunpack.c.l.b16 %v327
    %v360 = vunpack.c.l.b16 %v328
    %v361 = vunpack.c.l.b16 %v329
    %v362 = vunpack.c.l.b16 %v330
    %v363 = vunpack.c.l.b16 %v331
    %v364 = vunpack.c.l.b16 %v332
    %v365 = vunpack.c.l.b16 %v333
    %v366 = vunpack.c.l.b16 %v334
    %v367 = vpack.c.b16 %v352, %v351
    %v368 = vpack.c.b16 %v354, %v353
    %v369 = vpack.c.b16 %v356, %v355
    %v370 = vpack.c.b16 %v358, %v357
    %v371 = vpack.c.b16 %v360, %v359
    %v372 = vpack.c.b16 %v362, %v361
    %v373 = vpack.c.b16 %v364, %v363
    %v374 = vpack.c.b16 %v366, %v365
    %383 = vmatprep.subr.bf16.mxu0 0
    %384 = vmatpush1.bf16.msra.mxu0 %v374
    %385 = vmatprep.subr.bf16.mxu0 0
    %386 = vmatpush1.bf16.msra.mxu0 %v373
    %387 = vmatprep.subr.bf16.mxu0 0
    %388 = vmatpush1.bf16.msra.mxu0 %v372
    %389 = vmatprep.subr.bf16.mxu0 0
    %390 = vmatpush1.bf16.msra.mxu0 %v371
    %391 = vmatprep.subr.bf16.mxu0 0
    %392 = vmatpush1.bf16.msra.mxu0 %v370
    %393 = vmatprep.subr.bf16.mxu0 0
    %394 = vmatpush1.bf16.msra.mxu0 %v369
    %395 = vmatprep.subr.bf16.mxu0 0
    %396 = vmatpush1.bf16.msra.mxu0 %v368
    %397 = vmatprep.subr.bf16.mxu0 0
    %398 = vmatpush1.bf16.msra.mxu0 %v367
    %399 = vmatprep.subr.bf16.mxu0 0
    %400 = vmatpush2.bf16.msra.mxu0 0
    %401 = vmatprep.subr.bf16.mxu0 0
    %402 = vmatpush2.bf16.msra.mxu0 0
    %403 = vmatprep.subr.bf16.mxu0 0
    %404 = vmatpush2.bf16.msra.mxu0 0
    %405 = vmatprep.subr.bf16.mxu0 0
    %406 = vmatpush2.bf16.msra.mxu0 0
    %407 = vmatprep.subr.bf16.mxu0 0
    %408 = vmatpush2.bf16.msra.mxu0 0
    %409 = vmatprep.subr.bf16.mxu0 0
    %410 = vmatpush2.bf16.msra.mxu0 0
    %411 = vmatprep.subr.bf16.mxu0 0
    %412 = vmatpush2.bf16.msra.mxu0 0
    %413 = vmatprep.subr.bf16.mxu0 0
    %414 = vmatpush2.bf16.msra.mxu0 0
    %415 = vmatprep.mubr.bf16.mxu0 0
    %416 = vmatmul.mubr.bf16.gmra.mxu0 %v318
    %v417 = vpop.f32.mrf.mxu0
    %v418 = vadd.f32 0.0, %v417
    %v419 = vpop.f32.mrf.mxu0
    %v420 = vpop.f32.mrf.mxu0
    %v421 = vadd.f32 0.0, %v420
    %v422 = vpop.f32.mrf.mxu0
    %423 = vdwg.mxu0
    %424 = vst [vmem:[#allocation11] sm:$0xff] %v418
    %425 = vst [vmem:[#allocation11 + $0x8] sm:$0xff] %v421
    // Predicated region
    $region42: #{tpu_custom_call.1} parent=1 // pred_check
      _
    $region43: #{tpu_custom_call.1} parent=1 // pred_check_branch
      %427 = sbr.rel (0) target = $region45
    $region44: #{tpu_custom_call.1} parent=1 // pred_region
      %s429 = ssub.s32 256, 256
      %430 = vsyncadd [#allocation4], %s429
      %s431 = sshll.u32 [#allocation11], 4
      %s432 = int_to_ptr.vmem [resolvable:$true] %s431
      %437 = dma.vmem_to_hbm [thread:$0]  %s432, 256, %s5, [#allocation4], 128, 128, 8
    $region45: #{tpu_custom_call.1} parent=1 // pred_fallthru
      _
    // Predicated region
    $region46: #{tpu_custom_call.1} parent=1 // pred_check
      _
    $region47: #{tpu_custom_call.1} parent=1 // pred_check_branch
      %439 = sbr.rel (0) target = $region49
    $region48: #{tpu_custom_call.1} parent=1 // pred_region
      %440 = dma.done [#allocation4], 256
    $region49: #{tpu_custom_call.1} parent=1 // pred_fallthru
      _
    %441 = vsyncpa [#allocation3], 1
    %442 = vsyncpa [#allocation6], 1
    %443 = vsyncpa [#allocation9], 1
    %444 = vsyncpa [#allocation4], 1

</llo_original>
